<compile_context>
chip_gen: v6e
topology: v6e:2x2x1
jax: 0.10.0
libtpu: 0.0.40
codegen_flags: <defaults>
</compile_context>

<pallas_src>
import jax
import jax.numpy as jnp
from jax.experimental import pallas as pl
from jax.experimental.pallas import tpu as pltpu

LN_EPS = 1e-5  # PyTorch nn.LayerNorm default


def _layer_norm(v):
    # elementwise_affine=False -> pure normalization, no scale/shift
    mu = jnp.mean(v, axis=-1, keepdims=True)
    var = jnp.mean(jnp.square(v - mu), axis=-1, keepdims=True)
    return (v - mu) * jax.lax.rsqrt(var + LN_EPS)


def to_vector_kernel(x_ref, mask_ref,
                     w1_ref, b1_ref, w2_ref, b2_ref, w3_ref, b3_ref,
                     out_ref):
    x = x_ref[...].astype(jnp.float32)       # (TB, E, D)
    m = mask_ref[...].astype(jnp.float32)    # (TB, E)
    TB, E, D = x.shape

    # Hoist tiny weight/bias loads (no repeated broadcasts inside the body).
    w1 = w1_ref[...]
    b1 = b1_ref[...]
    w2 = w2_ref[...]
    b2 = b2_ref[...]
    w3 = w3_ref[...]
    b3 = b3_ref[...]

    # --- hidden stack, entirely in 2D (TB*E, .) ---
    h = jnp.maximum(_layer_norm(x), 0.0).reshape(TB * E, D)
    h = jnp.dot(h, w1, preferred_element_type=jnp.float32) + b1
    h = jnp.maximum(_layer_norm(h), 0.0)
    h = jnp.dot(h, w2, preferred_element_type=jnp.float32) + b2
    H = h.shape[-1]
    h3 = h.reshape(TB, E, H)                 # single reshape back to 3D

    # --- masked mean-pool over the entity axis as an MXU contraction ---
    cnt = jnp.sum(m, axis=-1, keepdims=True)                      # (TB, 1)
    pooled = jnp.einsum('bqe,beh->bqh', m[:, None, :], h3,
                        preferred_element_type=jnp.float32).reshape(TB, H)
    inv_cnt = pl.reciprocal(jnp.maximum(cnt, 1.0), approx=True)   # EUP slot
    pooled = pooled * inv_cnt

    # --- final: LayerNorm -> ReLU -> Linear ---
    y = jnp.maximum(_layer_norm(pooled), 0.0)
    y = jnp.dot(y, w3, preferred_element_type=jnp.float32) + b3
    out_ref[...] = y.astype(out_ref.dtype)


def to_vector(entity_embeddings, mask, params, *, block_b=256):
    """entity_embeddings: (B, E, D) f32, mask: (B, E) f32 -> (B, vector_stream_size)."""
    w1, b1, w2, b2, w3, b3 = params
    B, E, D = entity_embeddings.shape
    H1, H2 = w1.shape[1], w2.shape[1]
    out_dim = w3.shape[1]

    # Batch tile: sublane-aligned, sized far below v7x's (smallest) VMEM budget.
    TB = max(1, min(block_b, B))
    if TB != B:
        TB = pl.cdiv(TB, 8) * 8
    Bp = pl.cdiv(B, TB) * TB
    if Bp != B:
        pad = Bp - B
        entity_embeddings = jnp.pad(entity_embeddings, ((0, pad), (0, 0), (0, 0)))
        mask = jnp.pad(mask, ((0, pad), (0, 0)))  # zero mask -> clamp(1) handles it
    grid = (Bp // TB,)

    flops = 2 * Bp * E * (D * H1 + H1 * H2 + H2) + 2 * Bp * H2 * out_dim
    transcendentals = 2 * Bp * E + 2 * Bp
    bytes_accessed = 4 * (Bp * E * D + Bp * E + Bp * out_dim
                          + D * H1 + H1 + H1 * H2 + H2 + H2 * out_dim + out_dim)

    out = pl.pallas_call(
        to_vector_kernel,
        out_shape=jax.ShapeDtypeStruct((Bp, out_dim), jnp.float32),
        grid=grid,
        in_specs=[
            pl.BlockSpec((TB, E, D), lambda i: (i, 0, 0)),   # x: pipelined over batch
            pl.BlockSpec((TB, E), lambda i: (i, 0)),         # mask
            pl.BlockSpec(w1.shape, lambda i: (0, 0)),        # weights: constant block,
            pl.BlockSpec(b1.shape, lambda i: (0, 0)),        # fetched once
            pl.BlockSpec(w2.shape, lambda i: (0, 0)),
            pl.BlockSpec(b2.shape, lambda i: (0, 0)),
            pl.BlockSpec(w3.shape, lambda i: (0, 0)),
            pl.BlockSpec(b3.shape, lambda i: (0, 0)),
        ],
        out_specs=pl.BlockSpec((TB, out_dim), lambda i: (i, 0)),
        compiler_params=pltpu.CompilerParams(
            dimension_semantics=("parallel",)),
        cost_estimate=pl.CostEstimate(flops=flops,
                                      transcendentals=transcendentals,
                                      bytes_accessed=bytes_accessed),
    )(entity_embeddings, mask, w1, b1, w2, b2, w3, b3)
    return out[:B]


def to_vector_ref(x, mask, params):
    """Pure-JAX reference mirroring the PyTorch ToVector forward."""
    w1, b1, w2, b2, w3, b3 = params
    h = jnp.maximum(_layer_norm(x), 0.0) @ w1 + b1
    h = jnp.maximum(_layer_norm(h), 0.0) @ w2 + b2
    cnt = jnp.sum(mask, axis=-1, keepdims=True)
    pooled = jnp.sum(h * mask[..., None], axis=-2) / jnp.maximum(cnt, 1.0)
    return jnp.maximum(_layer_norm(pooled), 0.0) @ w3 + b3


def _init_linear(key, fan_in, fan_out):
    # deterministic synthetic init (stand-in for _layer_init); bias kept as (1, fan_out)
    w = jax.random.normal(key, (fan_in, fan_out), jnp.float32) / jnp.sqrt(float(fan_in))
    b = jnp.zeros((1, fan_out), jnp.float32)
    return w, b


if __name__ == "__main__":
    key = jax.random.PRNGKey(0)
    B, E = 2, 8
    units_stream_size = 32
    units_hidden_sizes = [32, 32]
    vector_stream_size = 32

    k = jax.random.split(key, 6)
    x = jax.random.normal(k[0], (B, E, units_stream_size), jnp.float32)
    mask = (jax.random.uniform(k[1], (B, E)) > 0.3).astype(jnp.float32)

    w1, b1 = _init_linear(k[2], units_stream_size, units_hidden_sizes[0])
    w2, b2 = _init_linear(k[3], units_hidden_sizes[0], units_hidden_sizes[1])
    w3, b3 = _init_linear(k[4], units_hidden_sizes[1], vector_stream_size)
    params = (w1, b1, w2, b2, w3, b3)

    out = to_vector(x, mask, params)
    jax.block_until_ready(out)
    assert out.shape == (B, vector_stream_size)
    ref = to_vector_ref(x, mask, params)
    assert jnp.allclose(out, ref, rtol=2e-2, atol=1e-3)

    # Exercise the pipelined multi-block path (grid > 1, padded batch).
    B2 = 10
    k2 = jax.random.split(jax.random.PRNGKey(1), 2)
    x2 = jax.random.normal(k2[0], (B2, E, units_stream_size), jnp.float32)
    mask2 = (jax.random.uniform(k2[1], (B2, E)) > 0.3).astype(jnp.float32)
    out2 = to_vector(x2, mask2, params, block_b=8)
    jax.block_until_ready(out2)
    ref2 = to_vector_ref(x2, mask2, params)
    assert out2.shape == (B2, vector_stream_size)
    assert jnp.allclose(out2, ref2, rtol=2e-2, atol=1e-3)

    print("KERNEL_OK")
</pallas_src>

<mosaic_0001>
module attributes {stable_mosaic.version = 11 : i64} {
  func.func @to_vector_kernel(%arg0: i32, %arg1: memref<2x8x32xf32, #tpu.memory_space<vmem>>, %arg2: memref<2x8xf32, #tpu.memory_space<vmem>>, %arg3: memref<32x32xf32, #tpu.memory_space<vmem>>, %arg4: memref<1x32xf32, #tpu.memory_space<vmem>>, %arg5: memref<32x32xf32, #tpu.memory_space<vmem>>, %arg6: memref<1x32xf32, #tpu.memory_space<vmem>>, %arg7: memref<32x32xf32, #tpu.memory_space<vmem>>, %arg8: memref<1x32xf32, #tpu.memory_space<vmem>>, %arg9: memref<2x32xf32, #tpu.memory_space<vmem>>) attributes {dimension_semantics = [#tpu.dimension_semantics<parallel>], iteration_bounds = array<i64: 1>, scalar_prefetch = 0 : i64, scratch_operands = 0 : i64, tpu.core_type = #tpu.core_type<tc>, window_params = [{transform_indices = @transform_0, window_bounds = array<i64: 2, 8, 32>}, {transform_indices = @transform_1, window_bounds = array<i64: 2, 8>}, {pipeline_mode = #tpu.pipeline_mode<synchronous>, transform_indices = @transform_2, window_bounds = array<i64: 32, 32>}, {pipeline_mode = #tpu.pipeline_mode<synchronous>, transform_indices = @transform_3, window_bounds = array<i64: 1, 32>}, {pipeline_mode = #tpu.pipeline_mode<synchronous>, transform_indices = @transform_4, window_bounds = array<i64: 32, 32>}, {pipeline_mode = #tpu.pipeline_mode<synchronous>, transform_indices = @transform_5, window_bounds = array<i64: 1, 32>}, {pipeline_mode = #tpu.pipeline_mode<synchronous>, transform_indices = @transform_6, window_bounds = array<i64: 32, 32>}, {pipeline_mode = #tpu.pipeline_mode<synchronous>, transform_indices = @transform_7, window_bounds = array<i64: 1, 32>}, {transform_indices = @transform_8, window_bounds = array<i64: 2, 32>}]} {
    %c0 = arith.constant 0 : index
    %c0_0 = arith.constant 0 : index
    %c0_1 = arith.constant 0 : index
    %0 = vector.load %arg1[%c0, %c0_0, %c0_1] : memref<2x8x32xf32, #tpu.memory_space<vmem>>, vector<2x8x32xf32>
    %c0_2 = arith.constant 0 : index
    %c0_3 = arith.constant 0 : index
    %1 = vector.load %arg2[%c0_2, %c0_3] : memref<2x8xf32, #tpu.memory_space<vmem>>, vector<2x8xf32>
    %c0_4 = arith.constant 0 : index
    %c0_5 = arith.constant 0 : index
    %2 = vector.load %arg3[%c0_4, %c0_5] : memref<32x32xf32, #tpu.memory_space<vmem>>, vector<32x32xf32>
    %c0_6 = arith.constant 0 : index
    %c0_7 = arith.constant 0 : index
    %3 = vector.load %arg4[%c0_6, %c0_7] : memref<1x32xf32, #tpu.memory_space<vmem>>, vector<1x32xf32>
    %c0_8 = arith.constant 0 : index
    %c0_9 = arith.constant 0 : index
    %4 = vector.load %arg5[%c0_8, %c0_9] : memref<32x32xf32, #tpu.memory_space<vmem>>, vector<32x32xf32>
    %c0_10 = arith.constant 0 : index
    %c0_11 = arith.constant 0 : index
    %5 = vector.load %arg6[%c0_10, %c0_11] : memref<1x32xf32, #tpu.memory_space<vmem>>, vector<1x32xf32>
    %c0_12 = arith.constant 0 : index
    %c0_13 = arith.constant 0 : index
    %6 = vector.load %arg7[%c0_12, %c0_13] : memref<32x32xf32, #tpu.memory_space<vmem>>, vector<32x32xf32>
    %c0_14 = arith.constant 0 : index
    %c0_15 = arith.constant 0 : index
    %7 = vector.load %arg8[%c0_14, %c0_15] : memref<1x32xf32, #tpu.memory_space<vmem>>, vector<1x32xf32>
    %cst = arith.constant dense<0.000000e+00> : vector<2x8xf32>
    %8 = vector.multi_reduction <add>, %0, %cst [2] : vector<2x8x32xf32> to vector<2x8xf32>
    %9 = vector.shape_cast %8 : vector<2x8xf32> to vector<2x8x1xf32>
    %cst_16 = arith.constant 3.200000e+01 : f32
    %10 = vector.broadcast %cst_16 : f32 to vector<2x8x1xf32>
    %11 = arith.divf %9, %10 : vector<2x8x1xf32>
    %12 = vector.broadcast %11 : vector<2x8x1xf32> to vector<2x8x32xf32>
    %13 = arith.subf %0, %12 : vector<2x8x32xf32>
    %14 = arith.mulf %13, %13 : vector<2x8x32xf32>
    %cst_17 = arith.constant dense<0.000000e+00> : vector<2x8xf32>
    %15 = vector.multi_reduction <add>, %14, %cst_17 [2] : vector<2x8x32xf32> to vector<2x8xf32>
    %16 = vector.shape_cast %15 : vector<2x8xf32> to vector<2x8x1xf32>
    %cst_18 = arith.constant 3.200000e+01 : f32
    %17 = vector.broadcast %cst_18 : f32 to vector<2x8x1xf32>
    %18 = arith.divf %16, %17 : vector<2x8x1xf32>
    %19 = vector.broadcast %11 : vector<2x8x1xf32> to vector<2x8x32xf32>
    %20 = arith.subf %0, %19 : vector<2x8x32xf32>
    %cst_19 = arith.constant 9.99999974E-6 : f32
    %21 = vector.broadcast %cst_19 : f32 to vector<2x8x1xf32>
    %22 = arith.addf %18, %21 : vector<2x8x1xf32>
    %23 = math.rsqrt %22 : vector<2x8x1xf32>
    %24 = vector.broadcast %23 : vector<2x8x1xf32> to vector<2x8x32xf32>
    %25 = arith.mulf %20, %24 : vector<2x8x32xf32>
    %cst_20 = arith.constant 0.000000e+00 : f32
    %26 = vector.broadcast %cst_20 : f32 to vector<2x8x32xf32>
    %27 = arith.maximumf %25, %26 : vector<2x8x32xf32>
    %28 = vector.shape_cast %27 : vector<2x8x32xf32> to vector<16x32xf32>
    %cst_21 = arith.constant dense<0.000000e+00> : vector<16x32xf32>
    %29 = tpu.matmul %28, %2, %cst_21 {dimension_numbers = #tpu.dot_dimension_numbers<[1], [0], [0], [1], [0, 0, 1, 1], [], []>} : vector<16x32xf32>, vector<32x32xf32>, vector<16x32xf32> -> vector<16x32xf32>
    %30 = vector.broadcast %3 : vector<1x32xf32> to vector<16x32xf32>
    %31 = arith.addf %29, %30 : vector<16x32xf32>
    %cst_22 = arith.constant dense<0.000000e+00> : vector<16xf32>
    %32 = vector.multi_reduction <add>, %31, %cst_22 [1] : vector<16x32xf32> to vector<16xf32>
    %33 = vector.shape_cast %32 : vector<16xf32> to vector<16x1xf32>
    %cst_23 = arith.constant 3.200000e+01 : f32
    %34 = vector.broadcast %cst_23 : f32 to vector<16x1xf32>
    %35 = arith.divf %33, %34 : vector<16x1xf32>
    %36 = vector.broadcast %35 : vector<16x1xf32> to vector<16x32xf32>
    %37 = arith.subf %31, %36 : vector<16x32xf32>
    %38 = arith.mulf %37, %37 : vector<16x32xf32>
    %cst_24 = arith.constant dense<0.000000e+00> : vector<16xf32>
    %39 = vector.multi_reduction <add>, %38, %cst_24 [1] : vector<16x32xf32> to vector<16xf32>
    %40 = vector.shape_cast %39 : vector<16xf32> to vector<16x1xf32>
    %cst_25 = arith.constant 3.200000e+01 : f32
    %41 = vector.broadcast %cst_25 : f32 to vector<16x1xf32>
    %42 = arith.divf %40, %41 : vector<16x1xf32>
    %43 = vector.broadcast %35 : vector<16x1xf32> to vector<16x32xf32>
    %44 = arith.subf %31, %43 : vector<16x32xf32>
    %cst_26 = arith.constant 9.99999974E-6 : f32
    %45 = vector.broadcast %cst_26 : f32 to vector<16x1xf32>
    %46 = arith.addf %42, %45 : vector<16x1xf32>
    %47 = math.rsqrt %46 : vector<16x1xf32>
    %48 = vector.broadcast %47 : vector<16x1xf32> to vector<16x32xf32>
    %49 = arith.mulf %44, %48 : vector<16x32xf32>
    %cst_27 = arith.constant 0.000000e+00 : f32
    %50 = vector.broadcast %cst_27 : f32 to vector<16x32xf32>
    %51 = arith.maximumf %49, %50 : vector<16x32xf32>
    %cst_28 = arith.constant dense<0.000000e+00> : vector<16x32xf32>
    %52 = tpu.matmul %51, %4, %cst_28 {dimension_numbers = #tpu.dot_dimension_numbers<[1], [0], [0], [1], [0, 0, 1, 1], [], []>} : vector<16x32xf32>, vector<32x32xf32>, vector<16x32xf32> -> vector<16x32xf32>
    %53 = vector.broadcast %5 : vector<1x32xf32> to vector<16x32xf32>
    %54 = arith.addf %52, %53 : vector<16x32xf32>
    %55 = vector.shape_cast %54 : vector<16x32xf32> to vector<2x8x32xf32>
    %cst_29 = arith.constant dense<0.000000e+00> : vector<2xf32>
    %56 = vector.multi_reduction <add>, %1, %cst_29 [1] : vector<2x8xf32> to vector<2xf32>
    %57 = vector.shape_cast %56 : vector<2xf32> to vector<2x1xf32>
    %58 = vector.shape_cast %1 : vector<2x8xf32> to vector<2x1x8xf32>
    "tpu.trace_start"() <{level = 10 : i32, message = "bqe,beh->bqh"}> : () -> ()
    %cst_30 = arith.constant dense<0.000000e+00> : vector<2x1x32xf32>
    %59 = tpu.matmul %58, %55, %cst_30 {dimension_numbers = #tpu.dot_dimension_numbers<[2], [1], [1], [2], [0, 0, 0, 1, 1, 2], [0], [0]>} : vector<2x1x8xf32>, vector<2x8x32xf32>, vector<2x1x32xf32> -> vector<2x1x32xf32>
    "tpu.trace_stop"() : () -> ()
    %60 = vector.shape_cast %59 : vector<2x1x32xf32> to vector<2x32xf32>
    %cst_31 = arith.constant 1.000000e+00 : f32
    %61 = vector.broadcast %cst_31 : f32 to vector<2x1xf32>
    %62 = arith.maximumf %57, %61 : vector<2x1xf32>
    %63 = tpu.reciprocal %62 {approx = true} : vector<2x1xf32> -> vector<2x1xf32>
    %64 = vector.broadcast %63 : vector<2x1xf32> to vector<2x32xf32>
    %65 = arith.mulf %60, %64 : vector<2x32xf32>
    %cst_32 = arith.constant dense<0.000000e+00> : vector<2xf32>
    %66 = vector.multi_reduction <add>, %65, %cst_32 [1] : vector<2x32xf32> to vector<2xf32>
    %67 = vector.shape_cast %66 : vector<2xf32> to vector<2x1xf32>
    %cst_33 = arith.constant 3.200000e+01 : f32
    %68 = vector.broadcast %cst_33 : f32 to vector<2x1xf32>
    %69 = arith.divf %67, %68 : vector<2x1xf32>
    %70 = vector.broadcast %69 : vector<2x1xf32> to vector<2x32xf32>
    %71 = arith.subf %65, %70 : vector<2x32xf32>
    %72 = arith.mulf %71, %71 : vector<2x32xf32>
    %cst_34 = arith.constant dense<0.000000e+00> : vector<2xf32>
    %73 = vector.multi_reduction <add>, %72, %cst_34 [1] : vector<2x32xf32> to vector<2xf32>
    %74 = vector.shape_cast %73 : vector<2xf32> to vector<2x1xf32>
    %cst_35 = arith.constant 3.200000e+01 : f32
    %75 = vector.broadcast %cst_35 : f32 to vector<2x1xf32>
    %76 = arith.divf %74, %75 : vector<2x1xf32>
    %77 = vector.broadcast %69 : vector<2x1xf32> to vector<2x32xf32>
    %78 = arith.subf %65, %77 : vector<2x32xf32>
    %cst_36 = arith.constant 9.99999974E-6 : f32
    %79 = vector.broadcast %cst_36 : f32 to vector<2x1xf32>
    %80 = arith.addf %76, %79 : vector<2x1xf32>
    %81 = math.rsqrt %80 : vector<2x1xf32>
    %82 = vector.broadcast %81 : vector<2x1xf32> to vector<2x32xf32>
    %83 = arith.mulf %78, %82 : vector<2x32xf32>
    %cst_37 = arith.constant 0.000000e+00 : f32
    %84 = vector.broadcast %cst_37 : f32 to vector<2x32xf32>
    %85 = arith.maximumf %83, %84 : vector<2x32xf32>
    %cst_38 = arith.constant dense<0.000000e+00> : vector<2x32xf32>
    %86 = tpu.matmul %85, %6, %cst_38 {dimension_numbers = #tpu.dot_dimension_numbers<[1], [0], [0], [1], [0, 0, 1, 1], [], []>} : vector<2x32xf32>, vector<32x32xf32>, vector<2x32xf32> -> vector<2x32xf32>
    %87 = vector.broadcast %7 : vector<1x32xf32> to vector<2x32xf32>
    %88 = arith.addf %86, %87 : vector<2x32xf32>
    %c0_39 = arith.constant 0 : index
    %c0_40 = arith.constant 0 : index
    %89 = vector.load %arg9[%c0_39, %c0_40] : memref<2x32xf32, #tpu.memory_space<vmem>>, vector<2x32xf32>
    tpu.vector_store %arg9[%c0_39, %c0_40], %88 {strides = array<i32>} : memref<2x32xf32, #tpu.memory_space<vmem>>, vector<2x32xf32>,
    return
  }
  func.func @transform_0(%arg0: i32) -> (i32, i32, i32) {
    %c0_i32 = arith.constant 0 : i32
    %c0_i32_0 = arith.constant 0 : i32
    %c0_i32_1 = arith.constant 0 : i32
    return %arg0, %c0_i32, %c0_i32_0 : i32, i32, i32
  }
  func.func @transform_1(%arg0: i32) -> (i32, i32) {
    %c0_i32 = arith.constant 0 : i32
    %c0_i32_0 = arith.constant 0 : i32
    return %arg0, %c0_i32 : i32, i32
  }
  func.func @transform_2(%arg0: i32) -> (i32, i32) {
    %c0_i32 = arith.constant 0 : i32
    %c0_i32_0 = arith.constant 0 : i32
    %c0_i32_1 = arith.constant 0 : i32
    return %c0_i32, %c0_i32_0 : i32, i32
  }
  func.func @transform_3(%arg0: i32) -> (i32, i32) {
    %c0_i32 = arith.constant 0 : i32
    %c0_i32_0 = arith.constant 0 : i32
    %c0_i32_1 = arith.constant 0 : i32
    return %c0_i32, %c0_i32_0 : i32, i32
  }
  func.func @transform_4(%arg0: i32) -> (i32, i32) {
    %c0_i32 = arith.constant 0 : i32
    %c0_i32_0 = arith.constant 0 : i32
    %c0_i32_1 = arith.constant 0 : i32
    return %c0_i32, %c0_i32_0 : i32, i32
  }
  func.func @transform_5(%arg0: i32) -> (i32, i32) {
    %c0_i32 = arith.constant 0 : i32
    %c0_i32_0 = arith.constant 0 : i32
    %c0_i32_1 = arith.constant 0 : i32
    return %c0_i32, %c0_i32_0 : i32, i32
  }
  func.func @transform_6(%arg0: i32) -> (i32, i32) {
    %c0_i32 = arith.constant 0 : i32
    %c0_i32_0 = arith.constant 0 : i32
    %c0_i32_1 = arith.constant 0 : i32
    return %c0_i32, %c0_i32_0 : i32, i32
  }
  func.func @transform_7(%arg0: i32) -> (i32, i32) {
    %c0_i32 = arith.constant 0 : i32
    %c0_i32_0 = arith.constant 0 : i32
    %c0_i32_1 = arith.constant 0 : i32
    return %c0_i32, %c0_i32_0 : i32, i32
  }
  func.func @transform_8(%arg0: i32) -> (i32, i32) {
    %c0_i32 = arith.constant 0 : i32
    %c0_i32_0 = arith.constant 0 : i32
    return %arg0, %c0_i32 : i32, i32
  }
}

</mosaic_0001>

<llo_original>
// kernel: tpu_custom_call.1
$region0: #{tpu_custom_call.1}
  #allocation0 [shape = 'u32[]', space=smem, size = 0x4, offset = 0x4, fixed_abs, tag = 'smem constant byte address 0x4 - core index']
  #allocation1 [shape = 'u32[144,128]{1,0:T(1,128)}', space=vmem, size = 0x12000, scoped, tag = 'internal scratch']
  %s0 = inlined_call_operand.hbm [shape: f32[2,8,32], index: 0, kind: input, shape index: {}]
  %s1 = inlined_call_operand.hbm [shape: f32[2,8], index: 1, kind: input, shape index: {}]
  %s2 = inlined_call_operand.hbm [shape: f32[32,32], index: 2, kind: input, shape index: {}]
  %s3 = inlined_call_operand.vmem [shape: f32[1,32], index: 3, kind: input, shape index: {}]
  %s4 = inlined_call_operand.hbm [shape: f32[32,32], index: 4, kind: input, shape index: {}]
  %s5 = inlined_call_operand.vmem [shape: f32[1,32], index: 5, kind: input, shape index: {}]
  %s6 = inlined_call_operand.hbm [shape: f32[32,32], index: 6, kind: input, shape index: {}]
  %s7 = inlined_call_operand.vmem [shape: f32[1,32], index: 7, kind: input, shape index: {}]
  %s8 = inlined_call_operand.hbm [shape: f32[2,32], index: 8, kind: output, shape index: {}]
  %s9 = sld [smem:[#allocation0]]
  $region62: #{tpu_custom_call.1} parent=0
    _
  %s11 = ssub.s32 1, %s9
  %s12 = scalar_select 0, %s11, %s9
  $region1: #{tpu_custom_call.1} parent=0
    #allocation2 [shape = 'u8[8192]{0}', space=vmem, size = 0x2000, scoped, tag = 'input window, operand 0, single buffered']
    #allocation3 [shape = 's32[1]{0}', space=sflag, size = 0x4, scoped, tag = 'scoped memory for tpu_custom_call.1']
    #allocation4 [shape = 's32[1]{0}', space=sflag, size = 0x4, scoped, tag = 'scoped memory for tpu_custom_call.1']
    #allocation5 [shape = 'u8[1024]{0}', space=vmem, size = 0x400, scoped, tag = 'input window, operand 1, single buffered']
    #allocation6 [shape = 's32[1]{0}', space=sflag, size = 0x4, scoped, tag = 'scoped memory for tpu_custom_call.1']
    #allocation7 [shape = 'u8[16384]{0}', space=vmem, size = 0x4000, scoped, tag = 'input window, operand 2, single buffered']
    #allocation8 [shape = 'u8[16384]{0}', space=vmem, size = 0x4000, scoped, tag = 'input window, operand 4, single buffered']
    #allocation9 [shape = 's32[1]{0}', space=sflag, size = 0x4, scoped, tag = 'scoped memory for tpu_custom_call.1']
    #allocation10 [shape = 'u8[16384]{0}', space=vmem, size = 0x4000, scoped, tag = 'input window, operand 6, single buffered']
    #allocation11 [shape = 'u8[1024]{0}', space=vmem, size = 0x400, scoped, tag = 'output window, operand 0, single buffered']
    %13 = vsyncpa [#allocation3], 0
    %14 = vsyncpa [#allocation6], 0
    %15 = vsyncpa [#allocation9], 0
    %16 = vsyncpa [#allocation4], 0
    // Predicated region
    $region2: #{tpu_custom_call.1} parent=1 // pred_check
      _
    $region3: #{tpu_custom_call.1} parent=1 // pred_check_branch
      %18 = sbr.rel (0) target = $region5
    $region4: #{tpu_custom_call.1} parent=1 // pred_region
      %s20 = ssub.s32 256, 256
      %21 = vsyncadd [#allocation3], %s20
      %s22 = sshll.u32 [#allocation2], 4
      %s23 = int_to_ptr.vmem [resolvable:$true] %s22
      %28 = dma.hbm_to_vmem [thread:$0]  %s0, 256, %s23, [#allocation3], 128, 128, 8
    $region5: #{tpu_custom_call.1} parent=1 // pred_fallthru
      _
    // Predicated region
    $region6: #{tpu_custom_call.1} parent=1 // pred_check
      _
    $region7: #{tpu_custom_call.1} parent=1 // pred_check_branch
      %30 = sbr.rel (0) target = $region9
    $region8: #{tpu_custom_call.1} parent=1 // pred_region
      %s32 = ssub.s32 32, 32
      %33 = vsyncadd [#allocation6], %s32
      %s35 = sshll.u32 [#allocation5], 4
      %s36 = int_to_ptr.vmem [resolvable:$true] %s35
      %38 = dma.hbm_to_vmem [thread:$0]  %s1, 32, %s36, [#allocation6]
    $region9: #{tpu_custom_call.1} parent=1 // pred_fallthru
      _
    // Predicated region
    $region10: #{tpu_custom_call.1} parent=1 // pred_check
      _
    $region11: #{tpu_custom_call.1} parent=1 // pred_check_branch
      %40 = sbr.rel (0) target = $region13
    $region12: #{tpu_custom_call.1} parent=1 // pred_region
      %s42 = ssub.s32 512, 512
      %43 = vsyncadd [#allocation6], %s42
      %s44 = sshll.u32 [#allocation7], 4
      %s45 = int_to_ptr.vmem [resolvable:$true] %s44
      %50 = dma.hbm_to_vmem [thread:$0]  %s2, 512, %s45, [#allocation6], 128, 128, 8
    $region13: #{tpu_custom_call.1} parent=1 // pred_fallthru
      _
    // Predicated region
    $region14: #{tpu_custom_call.1} parent=1 // pred_check
      _
    $region15: #{tpu_custom_call.1} parent=1 // pred_check_branch
      %52 = sbr.rel (0) target = $region17
    $region16: #{tpu_custom_call.1} parent=1 // pred_region
      _
    $region17: #{tpu_custom_call.1} parent=1 // pred_fallthru
      _
    // Predicated region
    $region18: #{tpu_custom_call.1} parent=1 // pred_check
      _
    $region19: #{tpu_custom_call.1} parent=1 // pred_check_branch
      %54 = sbr.rel (0) target = $region21
    $region20: #{tpu_custom_call.1} parent=1 // pred_region
      %s56 = ssub.s32 512, 512
      %57 = vsyncadd [#allocation9], %s56
      %s58 = sshll.u32 [#allocation8], 4
      %s59 = int_to_ptr.vmem [resolvable:$true] %s58
      %64 = dma.hbm_to_vmem [thread:$0]  %s4, 512, %s59, [#allocation9], 128, 128, 8
    $region21: #{tpu_custom_call.1} parent=1 // pred_fallthru
      _
    // Predicated region
    $region22: #{tpu_custom_call.1} parent=1 // pred_check
      _
    $region23: #{tpu_custom_call.1} parent=1 // pred_check_branch
      %66 = sbr.rel (0) target = $region25
    $region24: #{tpu_custom_call.1} parent=1 // pred_region
      _
    $region25: #{tpu_custom_call.1} parent=1 // pred_fallthru
      _
    // Predicated region
    $region26: #{tpu_custom_call.1} parent=1 // pred_check
      _
    $region27: #{tpu_custom_call.1} parent=1 // pred_check_branch
      %68 = sbr.rel (0) target = $region29
    $region28: #{tpu_custom_call.1} parent=1 // pred_region
      %s70 = ssub.s32 512, 512
      %71 = vsyncadd [#allocation9], %s70
      %s72 = sshll.u32 [#allocation10], 4
      %s73 = int_to_ptr.vmem [resolvable:$true] %s72
      %78 = dma.hbm_to_vmem [thread:$0]  %s6, 512, %s73, [#allocation9], 128, 128, 8
    $region29: #{tpu_custom_call.1} parent=1 // pred_fallthru
      _
    // Predicated region
    $region30: #{tpu_custom_call.1} parent=1 // pred_check
      _
    $region31: #{tpu_custom_call.1} parent=1 // pred_check_branch
      %80 = sbr.rel (0) target = $region33
    $region32: #{tpu_custom_call.1} parent=1 // pred_region
      _
    $region33: #{tpu_custom_call.1} parent=1 // pred_fallthru
      _
    // Predicated region
    $region34: #{tpu_custom_call.1} parent=1 // pred_check
      _
    $region35: #{tpu_custom_call.1} parent=1 // pred_check_branch
      %82 = sbr.rel (0) target = $region37
    $region36: #{tpu_custom_call.1} parent=1 // pred_region
      %83 = dma.done [#allocation3], 256
    $region37: #{tpu_custom_call.1} parent=1 // pred_fallthru
      _
    // Predicated region
    $region38: #{tpu_custom_call.1} parent=1 // pred_check
      _
    $region39: #{tpu_custom_call.1} parent=1 // pred_check_branch
      %85 = sbr.rel (0) target = $region41
    $region40: #{tpu_custom_call.1} parent=1 // pred_region
      %86 = dma.done [#allocation6], 32
    $region41: #{tpu_custom_call.1} parent=1 // pred_fallthru
      _
    // Predicated region
    $region42: #{tpu_custom_call.1} parent=1 // pred_check
      _
    $region43: #{tpu_custom_call.1} parent=1 // pred_check_branch
      %88 = sbr.rel (0) target = $region45
    $region44: #{tpu_custom_call.1} parent=1 // pred_region
      %89 = dma.done [#allocation6], 512
    $region45: #{tpu_custom_call.1} parent=1 // pred_fallthru
      _
    // Predicated region
    $region46: #{tpu_custom_call.1} parent=1 // pred_check
      _
    $region47: #{tpu_custom_call.1} parent=1 // pred_check_branch
      %91 = sbr.rel (0) target = $region49
    $region48: #{tpu_custom_call.1} parent=1 // pred_region
      %92 = dma.done [#allocation9], 512
    $region49: #{tpu_custom_call.1} parent=1 // pred_fallthru
      _
    // Predicated region
    $region50: #{tpu_custom_call.1} parent=1 // pred_check
      _
    $region51: #{tpu_custom_call.1} parent=1 // pred_check_branch
      %94 = sbr.rel (0) target = $region53
    $region52: #{tpu_custom_call.1} parent=1 // pred_region
      %95 = dma.done [#allocation9], 512
    $region53: #{tpu_custom_call.1} parent=1 // pred_fallthru
      _
    %v96 = vld [vmem:[#allocation2] sm:$0xff]
    %v97 = vld [vmem:[#allocation2 + $0x8] sm:$0xff]
    %v98 = vld [vmem:[#allocation5] sm:$0x3]
    %v99 = vld [vmem:[#allocation7] sm:$0xff]
    %v100 = vld [vmem:[#allocation7 + $0x8] sm:$0xff]
    %v101 = vld [vmem:[#allocation7 + $0x10] sm:$0xff]
    %v102 = vld [vmem:[#allocation7 + $0x18] sm:$0xff]
    %v103 = vld [vmem:[%s3] sm:$0x1]
    %v104 = vld [vmem:[#allocation8] sm:$0xff]
    %v105 = vld [vmem:[#allocation8 + $0x8] sm:$0xff]
    %v106 = vld [vmem:[#allocation8 + $0x10] sm:$0xff]
    %v107 = vld [vmem:[#allocation8 + $0x18] sm:$0xff]
    %v108 = vld [vmem:[%s5] sm:$0x1]
    %v109 = vld [vmem:[#allocation10] sm:$0xff]
    %v110 = vld [vmem:[#allocation10 + $0x8] sm:$0xff]
    %v111 = vld [vmem:[#allocation10 + $0x10] sm:$0xff]
    %v112 = vld [vmem:[#allocation10 + $0x18] sm:$0xff]
    %v113 = vld [vmem:[%s7] sm:$0x1]
    %vm114 = vcmask 261120
    %v115 = vsel %vm114, %v96, 0.0
    %116 = vadd.xlane.f32.xlu0 %v115
    %v117 = vpop.xlane.xlu0 %116
    %v118 = vsel %vm114, %v97, 0.0
    %119 = vadd.xlane.f32.xlu0 %v118
    %v120 = vpop.xlane.xlu0 %119
    %v121 = vrcp.pop 32.0
    %v122 = vmul.f32 %v117, %v121
    %v123 = vmul.f32 %v120, %v121
    %v124 = vsub.f32 %v96, %v122
    %v125 = vsub.f32 %v97, %v123
    %v126 = vmul.f32 %v124, %v124
    %v127 = vmul.f32 %v125, %v125
    %v128 = vsel %vm114, %v126, 0.0
    %129 = vadd.xlane.f32.xlu0 %v128
    %v130 = vpop.xlane.xlu0 %129
    %v131 = vsel %vm114, %v127, 0.0
    %132 = vadd.xlane.f32.xlu0 %v131
    %v133 = vpop.xlane.xlu0 %132
    %v134 = vmul.f32 %v130, %v121
    %v135 = vmul.f32 %v133, %v121
    %v136 = vadd.f32 %v134, 1e-05
    %v137 = vadd.f32 %v135, 1e-05
    %v138 = vrsqrt.pop %v136
    %v139 = vrsqrt.pop %v137
    %v140 = vmul.f32 %v124, %v138
    %v141 = vmul.f32 %v125, %v139
    %v142 = vmax.f32 %v140, 0.0
    %v143 = vmax.f32 %v141, 0.0
    %v145 = vlaneseq
    %v146 = vshrl.u32 %v145, 7
    %v147 = vsub.s32 0, %v146
    %v148 = vrot.slane %v103, %v147
    %v151 = vsel %vm114, %v142, 0
    %v154 = vsel %vm114, %v143, 0
    %156 = vmatprep.subr.mxu0 0.0
    %157 = vmatpush1.msra.mxu0 0.0
    %158 = vmatprep.subr.mxu0 0.0
    %159 = vmatpush1.msra.mxu0 0.0
    %160 = vmatprep.subr.mxu0 0.0
    %161 = vmatpush1.msra.mxu0 0.0
    %162 = vmatprep.subr.mxu0 0.0
    %163 = vmatpush1.msra.mxu0 0.0
    %164 = vmatprep.subr.mxu0 0.0
    %165 = vmatpush1.msra.mxu0 0.0
    %166 = vmatprep.subr.mxu0 0.0
    %167 = vmatpush1.msra.mxu0 0.0
    %168 = vmatprep.subr.mxu0 0.0
    %169 = vmatpush1.msra.mxu0 0.0
    %170 = vmatprep.subr.mxu0 0.0
    %171 = vmatpush1.msra.mxu0 0.0
    %172 = vmatprep.subr.mxu0 0.0
    %173 = vmatpush1.msra.mxu0 0.0
    %174 = vmatprep.subr.mxu0 0.0
    %175 = vmatpush1.msra.mxu0 0.0
    %176 = vmatprep.subr.mxu0 0.0
    %177 = vmatpush1.msra.mxu0 0.0
    %178 = vmatprep.subr.mxu0 0.0
    %179 = vmatpush1.msra.mxu0 0.0
    %180 = vmatprep.subr.mxu0 0.0
    %181 = vmatpush1.msra.mxu0 %v102
    %182 = vmatprep.subr.mxu0 0.0
    %183 = vmatpush1.msra.mxu0 %v101
    %184 = vmatprep.subr.mxu0 0.0
    %185 = vmatpush1.msra.mxu0 %v100
    %186 = vmatprep.subr.mxu0 0.0
    %187 = vmatpush1.msra.mxu0 %v99
    %188 = vmatprep.subr.mxu0 0.0
    %189 = vmatpush2.msra.mxu0 0.0
    %190 = vmatprep.subr.mxu0 0.0
    %191 = vmatpush2.msra.mxu0 0.0
    %192 = vmatprep.subr.mxu0 0.0
    %193 = vmatpush2.msra.mxu0 0.0
    %194 = vmatprep.subr.mxu0 0.0
    %195 = vmatpush2.msra.mxu0 0.0
    %196 = vmatprep.subr.mxu0 0.0
    %197 = vmatpush2.msra.mxu0 0.0
    %198 = vmatprep.subr.mxu0 0.0
    %199 = vmatpush2.msra.mxu0 0.0
    %200 = vmatprep.subr.mxu0 0.0
    %201 = vmatpush2.msra.mxu0 0.0
    %202 = vmatprep.subr.mxu0 0.0
    %203 = vmatpush2.msra.mxu0 0.0
    %204 = vmatprep.subr.mxu0 0.0
    %205 = vmatpush2.msra.mxu0 0.0
    %206 = vmatprep.subr.mxu0 0.0
    %207 = vmatpush2.msra.mxu0 0.0
    %208 = vmatprep.subr.mxu0 0.0
    %209 = vmatpush2.msra.mxu0 0.0
    %210 = vmatprep.subr.mxu0 0.0
    %211 = vmatpush2.msra.mxu0 0.0
    %212 = vmatprep.subr.mxu0 0.0
    %213 = vmatpush2.msra.mxu0 0.0
    %214 = vmatprep.subr.mxu0 0.0
    %215 = vmatpush2.msra.mxu0 0.0
    %216 = vmatprep.subr.mxu0 0.0
    %217 = vmatpush2.msra.mxu0 0.0
    %218 = vmatprep.subr.mxu0 0.0
    %219 = vmatpush2.msra.mxu0 0.0
    %220 = vmatprep.mubr.f32.mxu0 0.0
    %221 = vmatmul.mubr.f32.gmra.mxu0 %v151
    %v222 = vpop.f32.mrf.mxu0
    %v223 = vadd.f32 %v148, %v222
    %v224 = vpop.f32.mrf.mxu0
    %225 = vmatprep.mubr.f32.mxu0 0.0
    %226 = vmatmul.mubr.f32.gmra.mxu0 %v154
    %v227 = vpop.f32.mrf.mxu0
    %v228 = vadd.f32 %v148, %v227
    %v229 = vpop.f32.mrf.mxu0
    %230 = vdwg.mxu0
    %v231 = vsel %vm114, %v223, 0.0
    %232 = vadd.xlane.f32.xlu0 %v231
    %v233 = vpop.xlane.xlu0 %232
    %v234 = vsel %vm114, %v228, 0.0
    %235 = vadd.xlane.f32.xlu0 %v234
    %v236 = vpop.xlane.xlu0 %235
    %v237 = vmul.f32 %v233, %v121
    %v238 = vmul.f32 %v236, %v121
    %v239 = vsub.f32 %v223, %v237
    %v240 = vsub.f32 %v228, %v238
    %v241 = vmul.f32 %v239, %v239
    %v242 = vmul.f32 %v240, %v240
    %v243 = vsel %vm114, %v241, 0.0
    %244 = vadd.xlane.f32.xlu0 %v243
    %v245 = vpop.xlane.xlu0 %244
    %v246 = vsel %vm114, %v242, 0.0
    %247 = vadd.xlane.f32.xlu0 %v246
    %v248 = vpop.xlane.xlu0 %247
    %v249 = vmul.f32 %v245, %v121
    %v250 = vmul.f32 %v248, %v121
    %v251 = vadd.f32 %v249, 1e-05
    %v252 = vadd.f32 %v250, 1e-05
    %v253 = vrsqrt.pop %v251
    %v254 = vrsqrt.pop %v252
    %v255 = vmul.f32 %v239, %v253
    %v256 = vmul.f32 %v240, %v254
    %v257 = vmax.f32 %v255, 0.0
    %v258 = vmax.f32 %v256, 0.0
    %v260 = vlaneseq
    %v261 = vshrl.u32 %v260, 7
    %v262 = vsub.s32 0, %v261
    %v263 = vrot.slane %v108, %v262
    %v266 = vsel %vm114, %v257, 0
    %v269 = vsel %vm114, %v258, 0
    %271 = vmatprep.subr.mxu0 0.0
    %272 = vmatpush1.msra.mxu0 0.0
    %273 = vmatprep.subr.mxu0 0.0
    %274 = vmatpush1.msra.mxu0 0.0
    %275 = vmatprep.subr.mxu0 0.0
    %276 = vmatpush1.msra.mxu0 0.0
    %277 = vmatprep.subr.mxu0 0.0
    %278 = vmatpush1.msra.mxu0 0.0
    %279 = vmatprep.subr.mxu0 0.0
    %280 = vmatpush1.msra.mxu0 0.0
    %281 = vmatprep.subr.mxu0 0.0
    %282 = vmatpush1.msra.mxu0 0.0
    %283 = vmatprep.subr.mxu0 0.0
    %284 = vmatpush1.msra.mxu0 0.0
    %285 = vmatprep.subr.mxu0 0.0
    %286 = vmatpush1.msra.mxu0 0.0
    %287 = vmatprep.subr.mxu0 0.0
    %288 = vmatpush1.msra.mxu0 0.0
    %289 = vmatprep.subr.mxu0 0.0
    %290 = vmatpush1.msra.mxu0 0.0
    %291 = vmatprep.subr.mxu0 0.0
    %292 = vmatpush1.msra.mxu0 0.0
    %293 = vmatprep.subr.mxu0 0.0
    %294 = vmatpush1.msra.mxu0 0.0
    %295 = vmatprep.subr.mxu0 0.0
    %296 = vmatpush1.msra.mxu0 %v107
    %297 = vmatprep.subr.mxu0 0.0
    %298 = vmatpush1.msra.mxu0 %v106
    %299 = vmatprep.subr.mxu0 0.0
    %300 = vmatpush1.msra.mxu0 %v105
    %301 = vmatprep.subr.mxu0 0.0
    %302 = vmatpush1.msra.mxu0 %v104
    %303 = vmatprep.subr.mxu0 0.0
    %304 = vmatpush2.msra.mxu0 0.0
    %305 = vmatprep.subr.mxu0 0.0
    %306 = vmatpush2.msra.mxu0 0.0
    %307 = vmatprep.subr.mxu0 0.0
    %308 = vmatpush2.msra.mxu0 0.0
    %309 = vmatprep.subr.mxu0 0.0
    %310 = vmatpush2.msra.mxu0 0.0
    %311 = vmatprep.subr.mxu0 0.0
    %312 = vmatpush2.msra.mxu0 0.0
    %313 = vmatprep.subr.mxu0 0.0
    %314 = vmatpush2.msra.mxu0 0.0
    %315 = vmatprep.subr.mxu0 0.0
    %316 = vmatpush2.msra.mxu0 0.0
    %317 = vmatprep.subr.mxu0 0.0
    %318 = vmatpush2.msra.mxu0 0.0
    %319 = vmatprep.subr.mxu0 0.0
    %320 = vmatpush2.msra.mxu0 0.0
    %321 = vmatprep.subr.mxu0 0.0
    %322 = vmatpush2.msra.mxu0 0.0
    %323 = vmatprep.subr.mxu0 0.0
    %324 = vmatpush2.msra.mxu0 0.0
    %325 = vmatprep.subr.mxu0 0.0
    %326 = vmatpush2.msra.mxu0 0.0
    %327 = vmatprep.subr.mxu0 0.0
    %328 = vmatpush2.msra.mxu0 0.0
    %329 = vmatprep.subr.mxu0 0.0
    %330 = vmatpush2.msra.mxu0 0.0
    %331 = vmatprep.subr.mxu0 0.0
    %332 = vmatpush2.msra.mxu0 0.0
    %333 = vmatprep.subr.mxu0 0.0
    %334 = vmatpush2.msra.mxu0 0.0
    %335 = vmatprep.mubr.f32.mxu0 0.0
    %336 = vmatmul.mubr.f32.gmra.mxu0 %v266
    %v337 = vpop.f32.mrf.mxu0
    %v338 = vadd.f32 %v263, %v337
    %v339 = vpop.f32.mrf.mxu0
    %340 = vmatprep.mubr.f32.mxu0 0.0
    %341 = vmatmul.mubr.f32.gmra.mxu0 %v269
    %v342 = vpop.f32.mrf.mxu0
    %v343 = vadd.f32 %v263, %v342
    %v344 = vpop.f32.mrf.mxu0
    %345 = vdwg.mxu0
    %vm346 = vcmask 58368
    %v347 = vsel %vm346, %v98, 0.0
    %348 = vadd.xlane.f32.xlu0 %v347
    %v349 = vpop.xlane.xlu0 %348
    %v352 = vunpack.c.l.s4 1966171168
    %v353 = vunpack.c.0.s8 %v352
    %v354 = vlaneseq
    %v355 = vshrl.u32 %v354, 7
    %v356 = vsub.s32 %v353, %v355
    %v357 = vrot.slane %v98, %v356
    %v358 = vcombine.high %v357, %v357
    %v360 = vunpack.c.l.s4 1966171168
    %v361 = vunpack.c.0.s8 %v360
    %v362 = vlaneseq
    %v363 = vshrl.u32 %v362, 7
    %v364 = vsub.s32 %v361, %v363
    %v365 = vrot.slane %v357, %v364
    %v367 = vunpack.c.l.s4 1966171168
    %v368 = vunpack.c.0.s8 %v367
    %v369 = vlaneseq
    %v370 = vshrl.u32 %v369, 7
    %v371 = vsub.s32 %v368, %v370
    %v372 = vrot.slane %v358, %v371
    %vm373 = vcmask 64512
    %v374 = vsel %vm373, %v365, 0
    %376 = vmatprep.subr.mxu0 0.0
    %377 = vmatpush1.msra.mxu0 0.0
    %378 = vmatprep.subr.mxu0 0.0
    %379 = vmatpush1.msra.mxu0 0.0
    %380 = vmatprep.subr.mxu0 0.0
    %381 = vmatpush1.msra.mxu0 0.0
    %382 = vmatprep.subr.mxu0 0.0
    %383 = vmatpush1.msra.mxu0 0.0
    %384 = vmatprep.subr.mxu0 0.0
    %385 = vmatpush1.msra.mxu0 0.0
    %386 = vmatprep.subr.mxu0 0.0
    %387 = vmatpush1.msra.mxu0 0.0
    %388 = vmatprep.subr.mxu0 0.0
    %389 = vmatpush1.msra.mxu0 0.0
    %390 = vmatprep.subr.mxu0 0.0
    %391 = vmatpush1.msra.mxu0 0.0
    %392 = vmatprep.subr.mxu0 0.0
    %393 = vmatpush1.msra.mxu0 0.0
    %394 = vmatprep.subr.mxu0 0.0
    %395 = vmatpush1.msra.mxu0 0.0
    %396 = vmatprep.subr.mxu0 0.0
    %397 = vmatpush1.msra.mxu0 0.0
    %398 = vmatprep.subr.mxu0 0.0
    %399 = vmatpush1.msra.mxu0 0.0
    %400 = vmatprep.subr.mxu0 0.0
    %401 = vmatpush1.msra.mxu0 0.0
    %402 = vmatprep.subr.mxu0 0.0
    %403 = vmatpush1.msra.mxu0 0.0
    %404 = vmatprep.subr.mxu0 0.0
    %405 = vmatpush1.msra.mxu0 0.0
    %406 = vmatprep.subr.mxu0 0.0
    %407 = vmatpush1.msra.mxu0 %v338
    %408 = vmatprep.subr.mxu0 0.0
    %409 = vmatpush2.msra.mxu0 0.0
    %410 = vmatprep.subr.mxu0 0.0
    %411 = vmatpush2.msra.mxu0 0.0
    %412 = vmatprep.subr.mxu0 0.0
    %413 = vmatpush2.msra.mxu0 0.0
    %414 = vmatprep.subr.mxu0 0.0
    %415 = vmatpush2.msra.mxu0 0.0
    %416 = vmatprep.subr.mxu0 0.0
    %417 = vmatpush2.msra.mxu0 0.0
    %418 = vmatprep.subr.mxu0 0.0
    %419 = vmatpush2.msra.mxu0 0.0
    %420 = vmatprep.subr.mxu0 0.0
    %421 = vmatpush2.msra.mxu0 0.0
    %422 = vmatprep.subr.mxu0 0.0
    %423 = vmatpush2.msra.mxu0 0.0
    %424 = vmatprep.subr.mxu0 0.0
    %425 = vmatpush2.msra.mxu0 0.0
    %426 = vmatprep.subr.mxu0 0.0
    %427 = vmatpush2.msra.mxu0 0.0
    %428 = vmatprep.subr.mxu0 0.0
    %429 = vmatpush2.msra.mxu0 0.0
    %430 = vmatprep.subr.mxu0 0.0
    %431 = vmatpush2.msra.mxu0 0.0
    %432 = vmatprep.subr.mxu0 0.0
    %433 = vmatpush2.msra.mxu0 0.0
    %434 = vmatprep.subr.mxu0 0.0
    %435 = vmatpush2.msra.mxu0 0.0
    %436 = vmatprep.subr.mxu0 0.0
    %437 = vmatpush2.msra.mxu0 0.0
    %438 = vmatprep.subr.mxu0 0.0
    %439 = vmatpush2.msra.mxu0 0.0
    %440 = vmatprep.mubr.f32.mxu0 0.0
    %441 = vmatmul.mubr.f32.gmra.mxu0 %v374
    %v442 = vpop.f32.mrf.mxu0
    %v443 = vadd.f32 0.0, %v442
    %v444 = vpop.f32.mrf.mxu0
    %445 = vdwg.mxu0
    %v446 = vsel %vm373, %v372, 0
    %448 = vmatprep.subr.mxu0 0.0
    %449 = vmatpush1.msra.mxu0 0.0
    %450 = vmatprep.subr.mxu0 0.0
    %451 = vmatpush1.msra.mxu0 0.0
    %452 = vmatprep.subr.mxu0 0.0
    %453 = vmatpush1.msra.mxu0 0.0
    %454 = vmatprep.subr.mxu0 0.0
    %455 = vmatpush1.msra.mxu0 0.0
    %456 = vmatprep.subr.mxu0 0.0
    %457 = vmatpush1.msra.mxu0 0.0
    %458 = vmatprep.subr.mxu0 0.0
    %459 = vmatpush1.msra.mxu0 0.0
    %460 = vmatprep.subr.mxu0 0.0
    %461 = vmatpush1.msra.mxu0 0.0
    %462 = vmatprep.subr.mxu0 0.0
    %463 = vmatpush1.msra.mxu0 0.0
    %464 = vmatprep.subr.mxu0 0.0
    %465 = vmatpush1.msra.mxu0 0.0
    %466 = vmatprep.subr.mxu0 0.0
    %467 = vmatpush1.msra.mxu0 0.0
    %468 = vmatprep.subr.mxu0 0.0
    %469 = vmatpush1.msra.mxu0 0.0
    %470 = vmatprep.subr.mxu0 0.0
    %471 = vmatpush1.msra.mxu0 0.0
    %472 = vmatprep.subr.mxu0 0.0
    %473 = vmatpush1.msra.mxu0 0.0
    %474 = vmatprep.subr.mxu0 0.0
    %475 = vmatpush1.msra.mxu0 0.0
    %476 = vmatprep.subr.mxu0 0.0
    %477 = vmatpush1.msra.mxu0 0.0
    %478 = vmatprep.subr.mxu0 0.0
    %479 = vmatpush1.msra.mxu0 %v343
    %480 = vmatprep.subr.mxu0 0.0
    %481 = vmatpush2.msra.mxu0 0.0
    %482 = vmatprep.subr.mxu0 0.0
    %483 = vmatpush2.msra.mxu0 0.0
    %484 = vmatprep.subr.mxu0 0.0
    %485 = vmatpush2.msra.mxu0 0.0
    %486 = vmatprep.subr.mxu0 0.0
    %487 = vmatpush2.msra.mxu0 0.0
    %488 = vmatprep.subr.mxu0 0.0
    %489 = vmatpush2.msra.mxu0 0.0
    %490 = vmatprep.subr.mxu0 0.0
    %491 = vmatpush2.msra.mxu0 0.0
    %492 = vmatprep.subr.mxu0 0.0
    %493 = vmatpush2.msra.mxu0 0.0
    %494 = vmatprep.subr.mxu0 0.0
    %495 = vmatpush2.msra.mxu0 0.0
    %496 = vmatprep.subr.mxu0 0.0
    %497 = vmatpush2.msra.mxu0 0.0
    %498 = vmatprep.subr.mxu0 0.0
    %499 = vmatpush2.msra.mxu0 0.0
    %500 = vmatprep.subr.mxu0 0.0
    %501 = vmatpush2.msra.mxu0 0.0
    %502 = vmatprep.subr.mxu0 0.0
    %503 = vmatpush2.msra.mxu0 0.0
    %504 = vmatprep.subr.mxu0 0.0
    %505 = vmatpush2.msra.mxu0 0.0
    %506 = vmatprep.subr.mxu0 0.0
    %507 = vmatpush2.msra.mxu0 0.0
    %508 = vmatprep.subr.mxu0 0.0
    %509 = vmatpush2.msra.mxu0 0.0
    %510 = vmatprep.subr.mxu0 0.0
    %511 = vmatpush2.msra.mxu0 0.0
    %512 = vmatprep.mubr.f32.mxu0 0.0
    %513 = vmatmul.mubr.f32.gmra.mxu0 %v446
    %v514 = vpop.f32.mrf.mxu0
    %v515 = vadd.f32 0.0, %v514
    %v516 = vpop.f32.mrf.mxu0
    %517 = vdwg.mxu0
    %v518 = vmax.f32 %v349, 1.0
    %v519 = vrcp.pop %v518
    %v521 = vrot.slane %v519, 1
    %v524 = vmul.f32 %v443, %v519
    %v525 = vmul.f32 %v515, %v521
    %v528 = vrot.slane %v525, 7
    %vm529 = vcmask 1041409
    %v530 = vsel %vm529, %v528, %v524
    %vm532 = vcmask 254976
    %v533 = vsel %vm532, %v530, 0.0
    %534 = vadd.xlane.f32.xlu0 %v533
    %v535 = vpop.xlane.xlu0 %534
    %v536 = vmul.f32 %v535, %v121
    %v538 = vrot.slane %v536, 1
    %v541 = vsub.f32 %v524, %v536
    %v542 = vsub.f32 %v525, %v538
    %v543 = vmul.f32 %v541, %v541
    %v544 = vmul.f32 %v542, %v542
    %v547 = vrot.slane %v544, 7
    %v548 = vsel %vm529, %v547, %v543
    %v550 = vsel %vm532, %v548, 0.0
    %551 = vadd.xlane.f32.xlu0 %v550
    %v552 = vpop.xlane.xlu0 %551
    %v553 = vmul.f32 %v552, %v121
    %v554 = vadd.f32 %v553, 1e-05
    %v555 = vrsqrt.pop %v554
    %v557 = vrot.slane %v555, 1
    %v560 = vmul.f32 %v541, %v555
    %v561 = vmul.f32 %v542, %v557
    %v562 = vmax.f32 %v560, 0.0
    %v563 = vmax.f32 %v561, 0.0
    %v565 = vlaneseq
    %v566 = vshrl.u32 %v565, 7
    %v567 = vsub.s32 0, %v566
    %v568 = vrot.slane %v113, %v567
    %v572 = vrot.slane %v563, 7
    %v573 = vsel %vm529, %v572, %v562
    %v574 = vsel %vm114, %v573, 0
    %576 = vmatprep.subr.mxu0 0.0
    %577 = vmatpush1.msra.mxu0 0.0
    %578 = vmatprep.subr.mxu0 0.0
    %579 = vmatpush1.msra.mxu0 0.0
    %580 = vmatprep.subr.mxu0 0.0
    %581 = vmatpush1.msra.mxu0 0.0
    %582 = vmatprep.subr.mxu0 0.0
    %583 = vmatpush1.msra.mxu0 0.0
    %584 = vmatprep.subr.mxu0 0.0
    %585 = vmatpush1.msra.mxu0 0.0
    %586 = vmatprep.subr.mxu0 0.0
    %587 = vmatpush1.msra.mxu0 0.0
    %588 = vmatprep.subr.mxu0 0.0
    %589 = vmatpush1.msra.mxu0 0.0
    %590 = vmatprep.subr.mxu0 0.0
    %591 = vmatpush1.msra.mxu0 0.0
    %592 = vmatprep.subr.mxu0 0.0
    %593 = vmatpush1.msra.mxu0 0.0
    %594 = vmatprep.subr.mxu0 0.0
    %595 = vmatpush1.msra.mxu0 0.0
    %596 = vmatprep.subr.mxu0 0.0
    %597 = vmatpush1.msra.mxu0 0.0
    %598 = vmatprep.subr.mxu0 0.0
    %599 = vmatpush1.msra.mxu0 0.0
    %600 = vmatprep.subr.mxu0 0.0
    %601 = vmatpush1.msra.mxu0 %v112
    %602 = vmatprep.subr.mxu0 0.0
    %603 = vmatpush1.msra.mxu0 %v111
    %604 = vmatprep.subr.mxu0 0.0
    %605 = vmatpush1.msra.mxu0 %v110
    %606 = vmatprep.subr.mxu0 0.0
    %607 = vmatpush1.msra.mxu0 %v109
    %608 = vmatprep.subr.mxu0 0.0
    %609 = vmatpush2.msra.mxu0 0.0
    %610 = vmatprep.subr.mxu0 0.0
    %611 = vmatpush2.msra.mxu0 0.0
    %612 = vmatprep.subr.mxu0 0.0
    %613 = vmatpush2.msra.mxu0 0.0
    %614 = vmatprep.subr.mxu0 0.0
    %615 = vmatpush2.msra.mxu0 0.0
    %616 = vmatprep.subr.mxu0 0.0
    %617 = vmatpush2.msra.mxu0 0.0
    %618 = vmatprep.subr.mxu0 0.0
    %619 = vmatpush2.msra.mxu0 0.0
    %620 = vmatprep.subr.mxu0 0.0
    %621 = vmatpush2.msra.mxu0 0.0
    %622 = vmatprep.subr.mxu0 0.0
    %623 = vmatpush2.msra.mxu0 0.0
    %624 = vmatprep.subr.mxu0 0.0
    %625 = vmatpush2.msra.mxu0 0.0
    %626 = vmatprep.subr.mxu0 0.0
    %627 = vmatpush2.msra.mxu0 0.0
    %628 = vmatprep.subr.mxu0 0.0
    %629 = vmatpush2.msra.mxu0 0.0
    %630 = vmatprep.subr.mxu0 0.0
    %631 = vmatpush2.msra.mxu0 0.0
    %632 = vmatprep.subr.mxu0 0.0
    %633 = vmatpush2.msra.mxu0 0.0
    %634 = vmatprep.subr.mxu0 0.0
    %635 = vmatpush2.msra.mxu0 0.0
    %636 = vmatprep.subr.mxu0 0.0
    %637 = vmatpush2.msra.mxu0 0.0
    %638 = vmatprep.subr.mxu0 0.0
    %639 = vmatpush2.msra.mxu0 0.0
    %640 = vmatprep.mubr.f32.mxu0 0.0
    %641 = vmatmul.mubr.f32.gmra.mxu0 %v574
    %v642 = vpop.f32.mrf.mxu0
    %v643 = vadd.f32 %v568, %v642
    %v644 = vpop.f32.mrf.mxu0
    %645 = vdwg.mxu0
    %646 = vst.msk [vmem:[#allocation11] sm:$0x3] %vm532, %v643
    // Predicated region
    $region54: #{tpu_custom_call.1} parent=1 // pred_check
      _
    $region55: #{tpu_custom_call.1} parent=1 // pred_check_branch
      %648 = sbr.rel (0) target = $region57
    $region56: #{tpu_custom_call.1} parent=1 // pred_region
      %s650 = ssub.s32 32, 32
      %651 = vsyncadd [#allocation4], %s650
      %s653 = sshll.u32 [#allocation11], 4
      %s654 = int_to_ptr.vmem [resolvable:$true] %s653
      %656 = dma.vmem_to_hbm [thread:$0]  %s654, 32, %s8, [#allocation4]
    $region57: #{tpu_custom_call.1} parent=1 // pred_fallthru
      _
    // Predicated region
    $region58: #{tpu_custom_call.1} parent=1 // pred_check
      _
    $region59: #{tpu_custom_call.1} parent=1 // pred_check_branch
      %658 = sbr.rel (0) target = $region61
    $region60: #{tpu_custom_call.1} parent=1 // pred_region
      %659 = dma.done [#allocation4], 32
    $region61: #{tpu_custom_call.1} parent=1 // pred_fallthru
      _
    %660 = vsyncpa [#allocation3], 1
    %661 = vsyncpa [#allocation6], 1
    %662 = vsyncpa [#allocation9], 1
    %663 = vsyncpa [#allocation4], 1

</llo_original>
